<compile_context>
chip_gen: v5e
topology: v5e:2x2
jax: 0.10.0
libtpu: 0.0.40
codegen_flags: <defaults>
</compile_context>

<pallas_src>
import jax
import jax.numpy as jnp
from jax.experimental import pallas as pl
from jax.experimental.pallas import tpu as pltpu


def _round_up(x, m):
    return ((x + m - 1) // m) * m


def mlp_kernel(ids_ref, emb_ref, w1_ref, b1_ref, w2_ref, b2_ref, out_ref, acc_ref):
    """Grid = (batch tiles, vocab tiles). Vocab is the reduction axis."""
    k = pl.program_id(1)
    nk = pl.num_programs(1)
    tv = emb_ref.shape[0]          # vocab block size (static)

    @pl.when(k == 0)
    def _():
        acc_ref[...] = jnp.zeros_like(acc_ref)

    ids = ids_ref[...]             # (TM, S) int32
    tm, s = ids.shape

    # counts[b, v] = #occurrences of global token (k*tv + v) in row b.
    # Single fused compare over (TM, S, TV) + one reduction over S.
    v_iota = jax.lax.broadcasted_iota(jnp.int32, (tm, s, tv), 2) + k * tv
    one_hot = (ids[:, :, None] == v_iota).astype(jnp.float32)   # (TM, S, TV)
    counts = jnp.sum(one_hot, axis=1)                           # (TM, TV)

    # Partial embedding-bag sum for this vocab block (f32 accumulation).
    acc_ref[...] += jnp.dot(
        counts.astype(emb_ref.dtype), emb_ref[...],
        preferred_element_type=jnp.float32)

    @pl.when(k == nk - 1)
    def _():
        summed = acc_ref[...]                                    # (TM, E_p) f32
        h = jnp.dot(summed.astype(w1_ref.dtype), w1_ref[...],
                    preferred_element_type=jnp.float32) + b1_ref[...]
        out = jnp.dot(h.astype(w2_ref.dtype), w2_ref[...],
                      preferred_element_type=jnp.float32) + b2_ref[...]
        out_ref[...] = out.astype(out_ref.dtype)


def mlp_forward(ids, emb_table, w1, b1, w2, b2, *, tm=128, tv=512):
    """ids: (B, S) int32; emb_table: (V, E); w1: (E, H); w2: (H, T)."""
    B, S = ids.shape
    V, E = emb_table.shape
    H = w1.shape[1]
    T = w2.shape[1]
    b1 = b1.reshape(1, -1)
    b2 = b2.reshape(1, -1)

    # Lane/sublane-aligned padded dims.
    E_p = _round_up(E, 128)
    H_p = _round_up(H, 128)
    T_p = _round_up(T, 128)
    TM = min(tm, _round_up(B, 8))
    B_p = _round_up(B, TM)
    TV = min(tv, _round_up(V, 8))
    V_p = _round_up(V, TV)

    # Zero-padding is semantically neutral: padded vocab rows are zero
    # embeddings, padded feature columns carry zeros through both linears,
    # padded batch rows are sliced off below.
    ids_p = jnp.pad(ids, ((0, B_p - B), (0, 0)))
    emb_p = jnp.pad(emb_table, ((0, V_p - V), (0, E_p - E)))
    w1_p = jnp.pad(w1, ((0, E_p - E), (0, H_p - H)))
    b1_p = jnp.pad(b1, ((0, 0), (0, H_p - H)))
    w2_p = jnp.pad(w2, ((0, H_p - H), (0, T_p - T)))
    b2_p = jnp.pad(b2, ((0, 0), (0, T_p - T)))

    grid = (B_p // TM, V_p // TV)

    out_p = pl.pallas_call(
        mlp_kernel,
        out_shape=jax.ShapeDtypeStruct((B_p, T_p), jnp.float32),
        grid_spec=pltpu.PrefetchScalarGridSpec(
            num_scalar_prefetch=0,
            grid=grid,
            in_specs=[
                pl.BlockSpec((TM, S), lambda i, k: (i, 0)),      # ids
                pl.BlockSpec((TV, E_p), lambda i, k: (k, 0)),    # emb block
                pl.BlockSpec((E_p, H_p), lambda i, k: (0, 0)),   # w1
                pl.BlockSpec((1, H_p), lambda i, k: (0, 0)),     # b1
                pl.BlockSpec((H_p, T_p), lambda i, k: (0, 0)),   # w2
                pl.BlockSpec((1, T_p), lambda i, k: (0, 0)),     # b2
            ],
            out_specs=pl.BlockSpec((TM, T_p), lambda i, k: (i, 0)),
            scratch_shapes=[pltpu.VMEM((TM, E_p), jnp.float32)],
        ),
        compiler_params=pltpu.CompilerParams(
            dimension_semantics=("parallel", "arbitrary")),
    )(ids_p, emb_p, w1_p, b1_p, w2_p, b2_p)

    return out_p[:B, :T]


def mlp_reference(ids, emb_table, w1, b1, w2, b2):
    """Pure-JAX reference matching torch semantics (for verification)."""
    x = emb_table[ids]                 # (B, S, E)  == nn.Embedding lookup
    x = jnp.sum(x, axis=1)             # (B, E)     == torch.sum(x, 1)
    x = x @ w1 + b1                    # emb2hidden
    return x @ w2 + b2                 # hidden2tag


if __name__ == "__main__":
    # Small, module-consistent sizes (multiple batch / vocab tiles exercised
    # via tm=8, tv=64 so the grid is (2, 2)).
    vocab_size = 100
    emb_dim = 16
    hidden_dim = emb_dim               # hidden_dim defaults to emb_dim
    target_size = 8
    batch = 16
    seq = 8

    key = jax.random.PRNGKey(0)
    k_ids, k_emb, k_w1, k_b1, k_w2, k_b2 = jax.random.split(key, 6)

    ids = jax.random.randint(k_ids, (batch, seq), 0, vocab_size, dtype=jnp.int32)

    # Deterministic parameter init (Embedding ~ N(0,1); Linear ~ small uniform).
    emb_table = jax.random.normal(k_emb, (vocab_size, emb_dim), jnp.float32)
    lim1 = 1.0 / float(emb_dim) ** 0.5
    w1 = jax.random.uniform(k_w1, (emb_dim, hidden_dim), jnp.float32, -lim1, lim1)
    b1 = jax.random.uniform(k_b1, (hidden_dim,), jnp.float32, -lim1, lim1)
    lim2 = 1.0 / float(hidden_dim) ** 0.5
    w2 = jax.random.uniform(k_w2, (hidden_dim, target_size), jnp.float32, -lim2, lim2)
    b2 = jax.random.uniform(k_b2, (target_size,), jnp.float32, -lim2, lim2)

    out = mlp_forward(ids, emb_table, w1, b1, w2, b2, tm=8, tv=64)
    out = jax.block_until_ready(out)

    ref = mlp_reference(ids, emb_table, w1, b1, w2, b2)
    assert out.shape == (batch, target_size)
    assert jnp.allclose(out, ref, atol=1e-4, rtol=1e-4), "mismatch vs reference"

    print("KERNEL_OK")
</pallas_src>

<mosaic_0001>
module attributes {stable_mosaic.version = 11 : i64} {
  func.func @mlp_kernel(%arg0: i32, %arg1: i32, %arg2: memref<8x8xi32, #tpu.memory_space<vmem>>, %arg3: memref<64x128xf32, #tpu.memory_space<vmem>>, %arg4: memref<128x128xf32, #tpu.memory_space<vmem>>, %arg5: memref<1x128xf32, #tpu.memory_space<vmem>>, %arg6: memref<128x128xf32, #tpu.memory_space<vmem>>, %arg7: memref<1x128xf32, #tpu.memory_space<vmem>>, %arg8: memref<8x128xf32, #tpu.memory_space<vmem>>, %arg9: memref<8x128xf32, #tpu.memory_space<vmem>>) attributes {dimension_semantics = [#tpu.dimension_semantics<parallel>, #tpu.dimension_semantics<arbitrary>], iteration_bounds = array<i64: 2, 2>, scalar_prefetch = 0 : i64, scratch_operands = 1 : i64, tpu.core_type = #tpu.core_type<tc>, window_params = [{transform_indices = @transform_0, window_bounds = array<i64: 8, 8>}, {transform_indices = @transform_1, window_bounds = array<i64: 64, 128>}, {pipeline_mode = #tpu.pipeline_mode<synchronous>, transform_indices = @transform_2, window_bounds = array<i64: 128, 128>}, {pipeline_mode = #tpu.pipeline_mode<synchronous>, transform_indices = @transform_3, window_bounds = array<i64: 1, 128>}, {pipeline_mode = #tpu.pipeline_mode<synchronous>, transform_indices = @transform_4, window_bounds = array<i64: 128, 128>}, {pipeline_mode = #tpu.pipeline_mode<synchronous>, transform_indices = @transform_5, window_bounds = array<i64: 1, 128>}, {transform_indices = @transform_6, window_bounds = array<i64: 8, 128>}]} {
    %c0_i32 = arith.constant 0 : i32
    %0 = arith.cmpi eq, %arg1, %c0_i32 : i32
    %1 = arith.extui %0 : i1 to i32
    %c0_i32_0 = arith.constant 0 : i32
    %2 = arith.cmpi ne, %1, %c0_i32_0 : i32
    scf.if %2 {
      %cst_10 = arith.constant 0.000000e+00 : f32
      %22 = vector.broadcast %cst_10 : f32 to vector<8x128xf32>
      %c0_11 = arith.constant 0 : index
      %c0_12 = arith.constant 0 : index
      %23 = vector.load %arg9[%c0_11, %c0_12] : memref<8x128xf32, #tpu.memory_space<vmem>>, vector<8x128xf32>
      tpu.vector_store %arg9[%c0_11, %c0_12], %22 {strides = array<i32>} : memref<8x128xf32, #tpu.memory_space<vmem>>, vector<8x128xf32>,
    } else {
    }
    %c0 = arith.constant 0 : index
    %c0_1 = arith.constant 0 : index
    %3 = vector.load %arg2[%c0, %c0_1] : memref<8x8xi32, #tpu.memory_space<vmem>>, vector<8x8xi32>
    %4 = tpu.iota {dimensions = array<i32: 2>} : vector<8x8x64xi32>
    %c64_i32 = arith.constant 64 : i32
    %5 = arith.muli %arg1, %c64_i32 : i32
    %6 = vector.broadcast %5 : i32 to vector<8x8x64xi32>
    %7 = arith.addi %4, %6 : vector<8x8x64xi32>
    %8 = vector.shape_cast %3 : vector<8x8xi32> to vector<8x8x1xi32>
    %9 = vector.broadcast %8 : vector<8x8x1xi32> to vector<8x8x64xi32>
    %10 = arith.cmpi eq, %9, %7 : vector<8x8x64xi32>
    %11 = arith.extui %10 : vector<8x8x64xi1> to vector<8x8x64xi32>
    %12 = arith.sitofp %11 : vector<8x8x64xi32> to vector<8x8x64xf32>
    %cst = arith.constant dense<0.000000e+00> : vector<8x64xf32>
    %13 = vector.multi_reduction <add>, %12, %cst [1] : vector<8x8x64xf32> to vector<8x64xf32>
    %c0_2 = arith.constant 0 : index
    %c0_3 = arith.constant 0 : index
    %14 = vector.load %arg9[%c0_2, %c0_3] : memref<8x128xf32, #tpu.memory_space<vmem>>, vector<8x128xf32>
    %c0_4 = arith.constant 0 : index
    %c0_5 = arith.constant 0 : index
    %15 = vector.load %arg3[%c0_4, %c0_5] : memref<64x128xf32, #tpu.memory_space<vmem>>, vector<64x128xf32>
    %cst_6 = arith.constant dense<0.000000e+00> : vector<8x128xf32>
    %16 = tpu.matmul %13, %15, %cst_6 {dimension_numbers = #tpu.dot_dimension_numbers<[1], [0], [0], [1], [0, 0, 1, 1], [], []>} : vector<8x64xf32>, vector<64x128xf32>, vector<8x128xf32> -> vector<8x128xf32>
    %17 = arith.addf %14, %16 : vector<8x128xf32>
    %c0_7 = arith.constant 0 : index
    %c0_8 = arith.constant 0 : index
    %18 = vector.load %arg9[%c0_7, %c0_8] : memref<8x128xf32, #tpu.memory_space<vmem>>, vector<8x128xf32>
    tpu.vector_store %arg9[%c0_7, %c0_8], %17 {strides = array<i32>} : memref<8x128xf32, #tpu.memory_space<vmem>>, vector<8x128xf32>,
    %c1_i32 = arith.constant 1 : i32
    %19 = arith.cmpi eq, %arg1, %c1_i32 : i32
    %20 = arith.extui %19 : i1 to i32
    %c0_i32_9 = arith.constant 0 : i32
    %21 = arith.cmpi ne, %20, %c0_i32_9 : i32
    scf.if %21 {
      %c0_10 = arith.constant 0 : index
      %c0_11 = arith.constant 0 : index
      %22 = vector.load %arg9[%c0_10, %c0_11] : memref<8x128xf32, #tpu.memory_space<vmem>>, vector<8x128xf32>
      %c0_12 = arith.constant 0 : index
      %c0_13 = arith.constant 0 : index
      %23 = vector.load %arg4[%c0_12, %c0_13] : memref<128x128xf32, #tpu.memory_space<vmem>>, vector<128x128xf32>
      %cst_14 = arith.constant dense<0.000000e+00> : vector<8x128xf32>
      %24 = tpu.matmul %22, %23, %cst_14 {dimension_numbers = #tpu.dot_dimension_numbers<[1], [0], [0], [1], [0, 0, 1, 1], [], []>} : vector<8x128xf32>, vector<128x128xf32>, vector<8x128xf32> -> vector<8x128xf32>
      %c0_15 = arith.constant 0 : index
      %c0_16 = arith.constant 0 : index
      %25 = vector.load %arg5[%c0_15, %c0_16] : memref<1x128xf32, #tpu.memory_space<vmem>>, vector<1x128xf32>
      %26 = vector.broadcast %25 : vector<1x128xf32> to vector<8x128xf32>
      %27 = arith.addf %24, %26 : vector<8x128xf32>
      %c0_17 = arith.constant 0 : index
      %c0_18 = arith.constant 0 : index
      %28 = vector.load %arg6[%c0_17, %c0_18] : memref<128x128xf32, #tpu.memory_space<vmem>>, vector<128x128xf32>
      %cst_19 = arith.constant dense<0.000000e+00> : vector<8x128xf32>
      %29 = tpu.matmul %27, %28, %cst_19 {dimension_numbers = #tpu.dot_dimension_numbers<[1], [0], [0], [1], [0, 0, 1, 1], [], []>} : vector<8x128xf32>, vector<128x128xf32>, vector<8x128xf32> -> vector<8x128xf32>
      %c0_20 = arith.constant 0 : index
      %c0_21 = arith.constant 0 : index
      %30 = vector.load %arg7[%c0_20, %c0_21] : memref<1x128xf32, #tpu.memory_space<vmem>>, vector<1x128xf32>
      %31 = vector.broadcast %30 : vector<1x128xf32> to vector<8x128xf32>
      %32 = arith.addf %29, %31 : vector<8x128xf32>
      %c0_22 = arith.constant 0 : index
      %c0_23 = arith.constant 0 : index
      %33 = vector.load %arg8[%c0_22, %c0_23] : memref<8x128xf32, #tpu.memory_space<vmem>>, vector<8x128xf32>
      tpu.vector_store %arg8[%c0_22, %c0_23], %32 {strides = array<i32>} : memref<8x128xf32, #tpu.memory_space<vmem>>, vector<8x128xf32>,
    } else {
    }
    return
  }
  func.func @transform_0(%arg0: i32, %arg1: i32) -> (i32, i32) {
    %c0_i32 = arith.constant 0 : i32
    %c0_i32_0 = arith.constant 0 : i32
    return %arg0, %c0_i32 : i32, i32
  }
  func.func @transform_1(%arg0: i32, %arg1: i32) -> (i32, i32) {
    %c0_i32 = arith.constant 0 : i32
    %c0_i32_0 = arith.constant 0 : i32
    return %arg1, %c0_i32 : i32, i32
  }
  func.func @transform_2(%arg0: i32, %arg1: i32) -> (i32, i32) {
    %c0_i32 = arith.constant 0 : i32
    %c0_i32_0 = arith.constant 0 : i32
    %c0_i32_1 = arith.constant 0 : i32
    return %c0_i32, %c0_i32_0 : i32, i32
  }
  func.func @transform_3(%arg0: i32, %arg1: i32) -> (i32, i32) {
    %c0_i32 = arith.constant 0 : i32
    %c0_i32_0 = arith.constant 0 : i32
    %c0_i32_1 = arith.constant 0 : i32
    return %c0_i32, %c0_i32_0 : i32, i32
  }
  func.func @transform_4(%arg0: i32, %arg1: i32) -> (i32, i32) {
    %c0_i32 = arith.constant 0 : i32
    %c0_i32_0 = arith.constant 0 : i32
    %c0_i32_1 = arith.constant 0 : i32
    return %c0_i32, %c0_i32_0 : i32, i32
  }
  func.func @transform_5(%arg0: i32, %arg1: i32) -> (i32, i32) {
    %c0_i32 = arith.constant 0 : i32
    %c0_i32_0 = arith.constant 0 : i32
    %c0_i32_1 = arith.constant 0 : i32
    return %c0_i32, %c0_i32_0 : i32, i32
  }
  func.func @transform_6(%arg0: i32, %arg1: i32) -> (i32, i32) {
    %c0_i32 = arith.constant 0 : i32
    %c0_i32_0 = arith.constant 0 : i32
    return %arg0, %c0_i32 : i32, i32
  }
}

</mosaic_0001>

<llo_original>
// kernel: tpu_custom_call.1
$region0: #{tpu_custom_call.1}
  #allocation0 [shape = 'u32[]', space=smem, size = 0x4, offset = 0x4, fixed_abs, tag = 'smem constant byte address 0x4 - core index']
  #allocation1 [shape = 'u32[72,128]{1,0:T(1,128)}', space=vmem, size = 0x9000, scoped, tag = 'internal scratch']
  #allocation2 [shape = 'f32[8,128]{1,0:T(8,128)}', space=vmem, size = 0x1000, scoped, tag = 'scratch operand']
  %s0 = inlined_call_operand.vmem [shape: s32[16,8], index: 0, kind: input, shape index: {}]
  %s1 = inlined_call_operand.hbm [shape: f32[128,128], index: 1, kind: input, shape index: {}]
  %s2 = inlined_call_operand.hbm [shape: f32[128,128], index: 2, kind: input, shape index: {}]
  %s3 = inlined_call_operand.vmem [shape: f32[1,128], index: 3, kind: input, shape index: {}]
  %s4 = inlined_call_operand.hbm [shape: f32[128,128], index: 4, kind: input, shape index: {}]
  %s5 = inlined_call_operand.vmem [shape: f32[1,128], index: 5, kind: input, shape index: {}]
  %s6 = inlined_call_operand.hbm [shape: f32[16,128], index: 6, kind: output, shape index: {}]
  %s7 = sld [smem:[#allocation0]]
  $region77: #{tpu_custom_call.1} parent=0
    _
  %s9 = ssub.s32 1, %s7
  %s10 = scalar_select 0, %s9, %s7
  $region1: #{tpu_custom_call.1} parent=0
    #allocation3 [shape = 'u8[65536]{0}', space=vmem, size = 0x10000, scoped, tag = 'input window, operand 1']
    #allocation4 [shape = 's32[2]{0}', space=sflag, size = 0x8, scoped, tag = 'scoped memory for tpu_custom_call.1']
    #allocation5 [shape = 's32[2]{0}', space=sflag, size = 0x8, scoped, tag = 'scoped memory for tpu_custom_call.1']
    #allocation6 [shape = 'u8[65536]{0}', space=vmem, size = 0x10000, scoped, tag = 'input window, operand 2, single buffered']
    #allocation7 [shape = 's32[1]{0}', space=sflag, size = 0x4, scoped, tag = 'scoped memory for tpu_custom_call.1']
    #allocation8 [shape = 'u8[65536]{0}', space=vmem, size = 0x10000, scoped, tag = 'input window, operand 4, single buffered']
    #allocation9 [shape = 'u8[8192]{0}', space=vmem, size = 0x2000, scoped, tag = 'output window, operand 0']
    %11 = vsyncpa [#allocation4], 0
    %s12 = scalar_lea.sflag [#allocation4], 1
    %13 = vsyncpa %s12, 0
    %14 = vsyncpa [#allocation7], 0
    %15 = vsyncpa [#allocation5], 0
    %s16 = scalar_lea.sflag [#allocation5], 1
    %17 = vsyncpa %s16, 0
    loop: start=0, step=1, limit=6
    $region2: #{tpu_custom_call.1} parent=1 // loop_pre_header
      _
    $region3: #{tpu_custom_call.1} parent=1 // loop_header
      %s19 = sphi 0, %s23
      %p20 = scmp.ge.s32.totalorder %s19, 6
      %s26 = sphi 0, %s38
      %s27 = sphi 0, %s34
      %s28 = sphi 0, %s26
      %s29 = sphi 0, %s27
      %s30 = sphi 0, %s28
      %s31 = sphi 0, %s29
      %s41 = sphi 0, %s43
      %s44 = sphi 0, %s41
      %s45 = sphi 0, %s44
      %s61 = sphi 0, %s45
      %s67 = sphi 0, %s69
      %s70 = sphi 0, %s67
      %s71 = sphi 0, %s70
      %s87 = sphi 0, %s71
      %s91 = sphi 0, %s91
      %s93 = sphi 0, %s91
      %s94 = sphi 0, %s93
      %s108 = sphi 0, %s94
      %s112 = sphi 0, %s112
      %s114 = sphi 0, %s112
      %s115 = sphi 0, %s114
      %s129 = sphi 0, %s115
      %s133 = sphi 0, %s133
      %s135 = sphi 0, %s133
      %s136 = sphi 0, %s135
      %s150 = sphi 0, %s136
      %s154 = sphi 0, %s154
      %s156 = sphi 0, %s154
      %s157 = sphi 0, %s156
      %s171 = sphi 0, %s157
      %s177 = sphi 0, %s179
      %s180 = sphi 0, %s177
      %s181 = sphi 0, %s180
      %s197 = sphi 0, %s181
    $region4: #{tpu_custom_call.1} parent=1 // loop_header_branch
      %22 = sbr.rel (%p20) target = $region8
    $region5: #{tpu_custom_call.1} parent=1 // loop_body
      %s24 = ssub.s32 %s19, 1
      %s25 = ssub.s32 %s19, 2
      %s32 = sadd.s32 1, %s27
      %p33 = scmp.ge.s32.totalorder %s32, 2
      %s34 = scalar_select %p33, 0, %s32
      %s35 = sadd.s32 1, %s26
      %s36 = scalar_select %p33, %s35, %s26
      %p37 = scmp.ge.s32.totalorder %s36, 2
      %s38 = scalar_select %p37, 0, %s36
      %s39 = ssub.s32 %s26, %s38
      %p40 = scmp.eq.s32.totalorder %s39, 0
      %s42 = sadd.s32 %s41, 1
      %s43 = scalar_select %p40, %s41, %s42
      %p46 = pneg %p40
      %p47 = scmp.eq.s32.totalorder %s19, 3
      %p48 = por %p46, %p47
      %p49 = scmp.ne.s32.totalorder %s41, %s44
      %p50 = scmp.eq.s32.totalorder %s19, 0
      %p51 = por %p49, %p50
      %p52 = scmp.ne.s32.totalorder %s41, %s44
      %p53 = scmp.eq.s32.totalorder %s24, 3
      %p54 = por %p52, %p53
      %p55 = scmp.ne.s32.totalorder %s44, %s45
      %p56 = scmp.eq.s32.totalorder %s24, 0
      %p57 = por %p55, %p56
      %p58 = scmp.ne.s32.totalorder %s44, %s45
      %p59 = scmp.eq.s32.totalorder %s25, 3
      %p60 = por %p58, %p59
      %p62 = scmp.ne.s32.totalorder %s45, %s61
      %p63 = scmp.eq.s32.totalorder %s25, 0
      %p64 = por %p62, %p63
      %s65 = ssub.s32 %s27, %s34
      %p66 = scmp.eq.s32.totalorder %s65, 0
      %s68 = sadd.s32 %s67, 1
      %s69 = scalar_select %p66, %s67, %s68
      %p72 = pneg %p66
      %p73 = scmp.eq.s32.totalorder %s19, 3
      %p74 = por %p72, %p73
      %p75 = scmp.ne.s32.totalorder %s67, %s70
      %p76 = scmp.eq.s32.totalorder %s19, 0
      %p77 = por %p75, %p76
      %p78 = scmp.ne.s32.totalorder %s67, %s70
      %p79 = scmp.eq.s32.totalorder %s24, 3
      %p80 = por %p78, %p79
      %p81 = scmp.ne.s32.totalorder %s70, %s71
      %p82 = scmp.eq.s32.totalorder %s24, 0
      %p83 = por %p81, %p82
      %p84 = scmp.ne.s32.totalorder %s70, %s71
      %p85 = scmp.eq.s32.totalorder %s25, 3
      %p86 = por %p84, %p85
      %p88 = scmp.ne.s32.totalorder %s71, %s87
      %p89 = scmp.eq.s32.totalorder %s25, 0
      %p90 = por %p88, %p89
      %s92 = sadd.s32 %s91, 1
      %p95 = scmp.eq.s32.totalorder %s19, 3
      %p96 = scmp.ne.s32.totalorder %s91, %s93
      %p97 = scmp.eq.s32.totalorder %s19, 0
      %p98 = por %p96, %p97
      %p99 = scmp.ne.s32.totalorder %s91, %s93
      %p100 = scmp.eq.s32.totalorder %s24, 3
      %p101 = por %p99, %p100
      %p102 = scmp.ne.s32.totalorder %s93, %s94
      %p103 = scmp.eq.s32.totalorder %s24, 0
      %p104 = por %p102, %p103
      %p105 = scmp.ne.s32.totalorder %s93, %s94
      %p106 = scmp.eq.s32.totalorder %s25, 3
      %p107 = por %p105, %p106
      %p109 = scmp.ne.s32.totalorder %s94, %s108
      %p110 = scmp.eq.s32.totalorder %s25, 0
      %p111 = por %p109, %p110
      %s113 = sadd.s32 %s112, 1
      %p116 = scmp.eq.s32.totalorder %s19, 3
      %p117 = scmp.ne.s32.totalorder %s112, %s114
      %p118 = scmp.eq.s32.totalorder %s19, 0
      %p119 = por %p117, %p118
      %p120 = scmp.ne.s32.totalorder %s112, %s114
      %p121 = scmp.eq.s32.totalorder %s24, 3
      %p122 = por %p120, %p121
      %p123 = scmp.ne.s32.totalorder %s114, %s115
      %p124 = scmp.eq.s32.totalorder %s24, 0
      %p125 = por %p123, %p124
      %p126 = scmp.ne.s32.totalorder %s114, %s115
      %p127 = scmp.eq.s32.totalorder %s25, 3
      %p128 = por %p126, %p127
      %p130 = scmp.ne.s32.totalorder %s115, %s129
      %p131 = scmp.eq.s32.totalorder %s25, 0
      %p132 = por %p130, %p131
      %s134 = sadd.s32 %s133, 1
      %p137 = scmp.eq.s32.totalorder %s19, 3
      %p138 = scmp.ne.s32.totalorder %s133, %s135
      %p139 = scmp.eq.s32.totalorder %s19, 0
      %p140 = por %p138, %p139
      %p141 = scmp.ne.s32.totalorder %s133, %s135
      %p142 = scmp.eq.s32.totalorder %s24, 3
      %p143 = por %p141, %p142
      %p144 = scmp.ne.s32.totalorder %s135, %s136
      %p145 = scmp.eq.s32.totalorder %s24, 0
      %p146 = por %p144, %p145
      %p147 = scmp.ne.s32.totalorder %s135, %s136
      %p148 = scmp.eq.s32.totalorder %s25, 3
      %p149 = por %p147, %p148
      %p151 = scmp.ne.s32.totalorder %s136, %s150
      %p152 = scmp.eq.s32.totalorder %s25, 0
      %p153 = por %p151, %p152
      %s155 = sadd.s32 %s154, 1
      %p158 = scmp.eq.s32.totalorder %s19, 3
      %p159 = scmp.ne.s32.totalorder %s154, %s156
      %p160 = scmp.eq.s32.totalorder %s19, 0
      %p161 = por %p159, %p160
      %p162 = scmp.ne.s32.totalorder %s154, %s156
      %p163 = scmp.eq.s32.totalorder %s24, 3
      %p164 = por %p162, %p163
      %p165 = scmp.ne.s32.totalorder %s156, %s157
      %p166 = scmp.eq.s32.totalorder %s24, 0
      %p167 = por %p165, %p166
      %p168 = scmp.ne.s32.totalorder %s156, %s157
      %p169 = scmp.eq.s32.totalorder %s25, 3
      %p170 = por %p168, %p169
      %p172 = scmp.ne.s32.totalorder %s157, %s171
      %p173 = scmp.eq.s32.totalorder %s25, 0
      %p174 = por %p172, %p173
      %s175 = ssub.s32 %s26, %s38
      %p176 = scmp.eq.s32.totalorder %s175, 0
      %s178 = sadd.s32 %s177, 1
      %s179 = scalar_select %p176, %s177, %s178
      %p182 = pneg %p176
      %p183 = scmp.eq.s32.totalorder %s19, 3
      %p184 = por %p182, %p183
      %p185 = scmp.ne.s32.totalorder %s177, %s180
      %p186 = scmp.eq.s32.totalorder %s19, 0
      %p187 = por %p185, %p186
      %p188 = scmp.ne.s32.totalorder %s177, %s180
      %p189 = scmp.eq.s32.totalorder %s24, 3
      %p190 = por %p188, %p189
      %p191 = scmp.ne.s32.totalorder %s180, %s181
      %p192 = scmp.eq.s32.totalorder %s24, 0
      %p193 = por %p191, %p192
      %p194 = scmp.ne.s32.totalorder %s180, %s181
      %p195 = scmp.eq.s32.totalorder %s25, 3
      %p196 = por %p194, %p195
      %p198 = scmp.ne.s32.totalorder %s181, %s197
      %p199 = scmp.eq.s32.totalorder %s25, 0
      %p200 = por %p198, %p199
      %p201 = scmp.le.s32.totalorder 1, %s19
      %p202 = scmp.lt.s32.totalorder %s19, 5
      %p203 = pnand %p201, %p202
      %p204 = pneg %p203
      // Predicated region
      $region9: #{tpu_custom_call.1} parent=5 // pred_check
        _
      $region10: #{tpu_custom_call.1} parent=5 // pred_check_branch
        %206 = sbr.rel (%p203) target = $region12
      $region11: #{tpu_custom_call.1} parent=5 // pred_region
        %s207 = ssub.s32 %s19, 1
        // Predicated region
        $region13: #{tpu_custom_call.1} parent=11 // pred_check
          %p208 = pneg %p104
        $region14: #{tpu_custom_call.1} parent=11 // pred_check_branch
          %210 = sbr.rel (%p208) target = $region16
        $region15: #{tpu_custom_call.1} parent=11 // pred_region
          %212 = vsyncadd [#allocation7], 0
          %s213 = sshll.u32 %s2, 4
          %s214 = int_to_ptr.hbm [resolvable:$true] %s213
          %s215 = sshll.u32 [#allocation6], 4
          %s216 = int_to_ptr.vmem [resolvable:$true] %s215
          %221 = dma.hbm_to_vmem [thread:$0]  %s214, 2048, %s216, [#allocation7], 128, 128, 8
        $region16: #{tpu_custom_call.1} parent=11 // pred_fallthru
          _
        // Predicated region
        $region17: #{tpu_custom_call.1} parent=11 // pred_check
          %p222 = pneg %p125
        $region18: #{tpu_custom_call.1} parent=11 // pred_check_branch
          %224 = sbr.rel (%p222) target = $region20
        $region19: #{tpu_custom_call.1} parent=11 // pred_region
          _
        $region20: #{tpu_custom_call.1} parent=11 // pred_fallthru
          _
        // Predicated region
        $region21: #{tpu_custom_call.1} parent=11 // pred_check
          %p225 = pneg %p146
        $region22: #{tpu_custom_call.1} parent=11 // pred_check_branch
          %227 = sbr.rel (%p225) target = $region24
        $region23: #{tpu_custom_call.1} parent=11 // pred_region
          %229 = vsyncadd [#allocation7], 0
          %s230 = sshll.u32 %s4, 4
          %s231 = int_to_ptr.hbm [resolvable:$true] %s230
          %s232 = sshll.u32 [#allocation8], 4
          %s233 = int_to_ptr.vmem [resolvable:$true] %s232
          %238 = dma.hbm_to_vmem [thread:$0]  %s231, 2048, %s233, [#allocation7], 128, 128, 8
        $region24: #{tpu_custom_call.1} parent=11 // pred_fallthru
          _
        // Predicated region
        $region25: #{tpu_custom_call.1} parent=11 // pred_check
          %p239 = pneg %p167
        $region26: #{tpu_custom_call.1} parent=11 // pred_check_branch
          %241 = sbr.rel (%p239) target = $region28
        $region27: #{tpu_custom_call.1} parent=11 // pred_region
          _
        $region28: #{tpu_custom_call.1} parent=11 // pred_fallthru
          _
      $region12: #{tpu_custom_call.1} parent=5 // pred_fallthru
        _
      %p242 = scmp.lt.s32.totalorder %s19, 4
      // Predicated region
      $region29: #{tpu_custom_call.1} parent=5 // pred_check
        %p243 = pneg %p242
      $region30: #{tpu_custom_call.1} parent=5 // pred_check_branch
        %245 = sbr.rel (%p243) target = $region32
      $region31: #{tpu_custom_call.1} parent=5 // pred_region
        // Predicated region
        $region33: #{tpu_custom_call.1} parent=31 // pred_check
          %p246 = pneg %p51
        $region34: #{tpu_custom_call.1} parent=31 // pred_check_branch
          %248 = sbr.rel (%p246) target = $region36
        $region35: #{tpu_custom_call.1} parent=31 // pred_region
          %p249 = scmp.lt.s32.totalorder %s26, 1
          %s250 = scalar_select %p249, %s26, 1
          %s251 = smul.addr %s250, 8
          %s252 = scalar_lea.vmem %s0, %s251
        $region36: #{tpu_custom_call.1} parent=31 // pred_fallthru
          _
        // Predicated region
        $region37: #{tpu_custom_call.1} parent=31 // pred_check
          %p253 = pneg %p77
        $region38: #{tpu_custom_call.1} parent=31 // pred_check_branch
          %255 = sbr.rel (%p253) target = $region40
        $region39: #{tpu_custom_call.1} parent=31 // pred_region
          %s256 = sand.u32 %s67, 1
          %s257 = scalar_lea.sflag [#allocation4], %s256
          %s258 = sand.u32 %s67, 1
          %s259 = smul.addr %s258, 64
          %s260 = scalar_lea.vmem [#allocation3], %s259
          %s261 = smul.u32 8, %s27
          %263 = vsyncadd %s257, 0
          %s264 = smul.addr %s261, 8
          %s265 = scalar_lea.hbm %s1, %s264
          %s266 = sshll.u32 %s265, 4
          %s267 = int_to_ptr.hbm [resolvable:$true] %s266
          %s268 = sshll.u32 %s260, 4
          %s269 = int_to_ptr.vmem [resolvable:$true] %s268
          %274 = dma.hbm_to_vmem [thread:$0]  %s267, 1024, %s269, %s257, 128, 128, 8
        $region40: #{tpu_custom_call.1} parent=31 // pred_fallthru
          _
      $region32: #{tpu_custom_call.1} parent=5 // pred_fallthru
        _
      %p275 = scmp.le.s32.totalorder 1, %s19
      %p276 = scmp.lt.s32.totalorder %s19, 5
      %p277 = pnand %p275, %p276
      %p278 = pneg %p277
      // Predicated region
      $region41: #{tpu_custom_call.1} parent=5 // pred_check
        _
      $region42: #{tpu_custom_call.1} parent=5 // pred_check_branch
        %280 = sbr.rel (%p277) target = $region44
      $region43: #{tpu_custom_call.1} parent=5 // pred_region
        %s281 = ssub.s32 %s19, 1
        %s282 = sand.u32 %s70, 1
        %s283 = scalar_lea.sflag [#allocation4], %s282
        %s284 = sand.u32 %s70, 1
        %s285 = smul.addr %s284, 64
        %s286 = scalar_lea.vmem [#allocation3], %s285
        // Predicated region
        $region45: #{tpu_custom_call.1} parent=43 // pred_check
          %p287 = pneg %p83
        $region46: #{tpu_custom_call.1} parent=43 // pred_check_branch
          %289 = sbr.rel (%p287) target = $region48
        $region47: #{tpu_custom_call.1} parent=43 // pred_region
          %291 = dma.done %s283, 1024
        $region48: #{tpu_custom_call.1} parent=43 // pred_fallthru
          _
        // Predicated region
        $region49: #{tpu_custom_call.1} parent=43 // pred_check
          %p292 = pneg %p104
        $region50: #{tpu_custom_call.1} parent=43 // pred_check_branch
          %294 = sbr.rel (%p292) target = $region52
        $region51: #{tpu_custom_call.1} parent=43 // pred_region
          %296 = dma.done [#allocation7], 2048
        $region52: #{tpu_custom_call.1} parent=43 // pred_fallthru
          _
        // Predicated region
        $region53: #{tpu_custom_call.1} parent=43 // pred_check
          %p297 = pneg %p146
        $region54: #{tpu_custom_call.1} parent=43 // pred_check_branch
          %299 = sbr.rel (%p297) target = $region56
        $region55: #{tpu_custom_call.1} parent=43 // pred_region
          %301 = dma.done [#allocation7], 2048
        $region56: #{tpu_custom_call.1} parent=43 // pred_fallthru
          _
        %p302 = scmp.lt.s32.totalorder %s28, 1
        %s303 = scalar_select %p302, %s28, 1
        %s304 = smul.addr %s303, 8
        %s305 = scalar_lea.vmem %s0, %s304
        %p306 = pneg %p57
        %p307 = pneg %p54
        %s308 = sand.u32 %s70, 1
        %s309 = scalar_lea.sflag [#allocation4], %s308
        %s310 = sand.u32 %s70, 1
        %s311 = smul.addr %s310, 64
        %s312 = scalar_lea.vmem [#allocation3], %s311
        %p313 = pneg %p83
        %p314 = pneg %p80
        %p315 = pneg %p104
        %p316 = pneg %p101
        %p317 = pneg %p125
        %p318 = pneg %p122
        %p319 = pneg %p146
        %p320 = pneg %p143
        %p321 = pneg %p167
        %p322 = pneg %p164
        %p323 = pneg %p193
        %p324 = pneg %p190
        %s325 = sand.u32 %s180, 1
        %s326 = scalar_lea.sflag [#allocation5], %s325
        %s327 = sand.u32 %s180, 1
        %s328 = smul.addr %s327, 8
        %s329 = scalar_lea.vmem [#allocation9], %s328
        %p330 = scmp.lt.s32.totalorder %s28, 1
        %s331 = scalar_select %p330, %s28, 1
        %s332 = smul.addr %s331, 8
        %s333 = scalar_lea.vmem %s0, %s332
        %s334 = smul.u32 8, %s29
        %p335 = scmp.eq.s32.totalorder %s29, 0
        // Predicated region
        $region57: #{tpu_custom_call.1} parent=43 // pred_check
          %p336 = pneg %p335
        $region58: #{tpu_custom_call.1} parent=43 // pred_check_branch
          %338 = sbr.rel (%p336) target = $region60
        $region59: #{tpu_custom_call.1} parent=43 // pred_region
          %339 = vst [vmem:[#allocation2] sm:$0xff] 0.0
        $region60: #{tpu_custom_call.1} parent=43 // pred_fallthru
          _
        %v340 = vld [vmem:[%s333] sm:$0xff]
        %v341 = vlaneseq
        %v342 = vand.u32 %v341, 127
        %s343 = smul.u32 %s29, 64
        %v344 = vstv %s343
        %v345 = vadd.s32 %v342, %v344
        %v346 = vperm.slane %v340, 0
        %v347 = vlaneseq
        %v348 = vshrl.u32 %v347, 7
        %350 = vset.pattern.permute.xlu0 %v348
        %351 = vperm.xlu0 %350, %v346
        %v352 = vpop.permute.xlu0 %351
        %v353 = vperm.slane %v340, 1
        %v354 = vlaneseq
        %v355 = vshrl.u32 %v354, 7
        %357 = vset.pattern.permute.xlu0 %v355
        %358 = vperm.xlu0 %357, %v353
        %v359 = vpop.permute.xlu0 %358
        %v360 = vperm.slane %v340, 2
        %v361 = vlaneseq
        %v362 = vshrl.u32 %v361, 7
        %364 = vset.pattern.permute.xlu0 %v362
        %365 = vperm.xlu0 %364, %v360
        %v366 = vpop.permute.xlu0 %365
        %v367 = vperm.slane %v340, 3
        %v368 = vlaneseq
        %v369 = vshrl.u32 %v368, 7
        %371 = vset.pattern.permute.xlu0 %v369
        %372 = vperm.xlu0 %371, %v367
        %v373 = vpop.permute.xlu0 %372
        %v374 = vperm.slane %v340, 4
        %v375 = vlaneseq
        %v376 = vshrl.u32 %v375, 7
        %378 = vset.pattern.permute.xlu0 %v376
        %379 = vperm.xlu0 %378, %v374
        %v380 = vpop.permute.xlu0 %379
        %v381 = vperm.slane %v340, 5
        %v382 = vlaneseq
        %v383 = vshrl.u32 %v382, 7
        %385 = vset.pattern.permute.xlu0 %v383
        %386 = vperm.xlu0 %385, %v381
        %v387 = vpop.permute.xlu0 %386
        %v388 = vperm.slane %v340, 6
        %v389 = vlaneseq
        %v390 = vshrl.u32 %v389, 7
        %392 = vset.pattern.permute.xlu0 %v390
        %393 = vperm.xlu0 %392, %v388
        %v394 = vpop.permute.xlu0 %393
        %v395 = vperm.slane %v340, 7
        %v396 = vlaneseq
        %v397 = vshrl.u32 %v396, 7
        %399 = vset.pattern.permute.xlu0 %v397
        %400 = vperm.xlu0 %399, %v395
        %v401 = vpop.permute.xlu0 %400
        %vm402 = vcmp.eq.s32.totalorder %v352, %v345
        %vm403 = vcmp.eq.s32.totalorder %v359, %v345
        %vm404 = vcmp.eq.s32.totalorder %v366, %v345
        %vm405 = vcmp.eq.s32.totalorder %v373, %v345
        %vm406 = vcmp.eq.s32.totalorder %v380, %v345
        %vm407 = vcmp.eq.s32.totalorder %v387, %v345
        %vm408 = vcmp.eq.s32.totalorder %v394, %v345
        %vm409 = vcmp.eq.s32.totalorder %v401, %v345
        %v410 = vsel %vm402, 1, 0
        %v411 = vsel %vm403, 1, 0
        %v412 = vsel %vm404, 1, 0
        %v413 = vsel %vm405, 1, 0
        %v414 = vsel %vm406, 1, 0
        %v415 = vsel %vm407, 1, 0
        %v416 = vsel %vm408, 1, 0
        %v417 = vsel %vm409, 1, 0
        %v418 = vcvt.s32.f32 %v410
        %v419 = vcvt.s32.f32 %v411
        %v420 = vcvt.s32.f32 %v412
        %v421 = vcvt.s32.f32 %v413
        %v422 = vcvt.s32.f32 %v414
        %v423 = vcvt.s32.f32 %v415
        %v424 = vcvt.s32.f32 %v416
        %v425 = vcvt.s32.f32 %v417
        %vm426 = vcmask 523264
        %v427 = vsel %vm426, %v418, 0.0
        %v428 = vrot.slane %v427, 4
        %v429 = vadd.f32 %v427, %v428
        %v430 = vrot.slane %v429, 2
        %v431 = vadd.f32 %v429, %v430
        %v432 = vrot.slane %v431, 1
        %v433 = vadd.f32 %v431, %v432
        %v434 = vsel %vm426, %v419, 0.0
        %v435 = vrot.slane %v434, 4
        %v436 = vadd.f32 %v434, %v435
        %v437 = vrot.slane %v436, 2
        %v438 = vadd.f32 %v436, %v437
        %v439 = vrot.slane %v438, 1
        %v440 = vadd.f32 %v438, %v439
        %v441 = vsel %vm426, %v420, 0.0
        %v442 = vrot.slane %v441, 4
        %v443 = vadd.f32 %v441, %v442
        %v444 = vrot.slane %v443, 2
        %v445 = vadd.f32 %v443, %v444
        %v446 = vrot.slane %v445, 1
        %v447 = vadd.f32 %v445, %v446
        %v448 = vsel %vm426, %v421, 0.0
        %v449 = vrot.slane %v448, 4
        %v450 = vadd.f32 %v448, %v449
        %v451 = vrot.slane %v450, 2
        %v452 = vadd.f32 %v450, %v451
        %v453 = vrot.slane %v452, 1
        %v454 = vadd.f32 %v452, %v453
        %v455 = vsel %vm426, %v422, 0.0
        %v456 = vrot.slane %v455, 4
        %v457 = vadd.f32 %v455, %v456
        %v458 = vrot.slane %v457, 2
        %v459 = vadd.f32 %v457, %v458
        %v460 = vrot.slane %v459, 1
        %v461 = vadd.f32 %v459, %v460
        %v462 = vsel %vm426, %v423, 0.0
        %v463 = vrot.slane %v462, 4
        %v464 = vadd.f32 %v462, %v463
        %v465 = vrot.slane %v464, 2
        %v466 = vadd.f32 %v464, %v465
        %v467 = vrot.slane %v466, 1
        %v468 = vadd.f32 %v466, %v467
        %v469 = vsel %vm426, %v424, 0.0
        %v470 = vrot.slane %v469, 4
        %v471 = vadd.f32 %v469, %v470
        %v472 = vrot.slane %v471, 2
        %v473 = vadd.f32 %v471, %v472
        %v474 = vrot.slane %v473, 1
        %v475 = vadd.f32 %v473, %v474
        %v476 = vsel %vm426, %v425, 0.0
        %v477 = vrot.slane %v476, 4
        %v478 = vadd.f32 %v476, %v477
        %v479 = vrot.slane %v478, 2
        %v480 = vadd.f32 %v478, %v479
        %v481 = vrot.slane %v480, 1
        %v482 = vadd.f32 %v480, %v481
        %v483 = vld [vmem:[#allocation2] sm:$0xff]
        %v484 = vld [vmem:[%s286] sm:$0xff]
        %v485 = vld [vmem:[%s286 + $0x8] sm:$0xff]
        %v486 = vld [vmem:[%s286 + $0x10] sm:$0xff]
        %v487 = vld [vmem:[%s286 + $0x18] sm:$0xff]
        %v488 = vld [vmem:[%s286 + $0x20] sm:$0xff]
        %v489 = vld [vmem:[%s286 + $0x28] sm:$0xff]
        %v490 = vld [vmem:[%s286 + $0x30] sm:$0xff]
        %v491 = vld [vmem:[%s286 + $0x38] sm:$0xff]
        %vm500 = vcmask 1041409
        %v501 = vsel %vm500, %v440, %v433
        %vm502 = vcmask 1042434
        %v503 = vsel %vm502, %v447, %v501
        %vm504 = vcmask 1043459
        %v505 = vsel %vm504, %v454, %v503
        %vm506 = vcmask 1044484
        %v507 = vsel %vm506, %v461, %v505
        %vm508 = vcmask 1045509
        %v509 = vsel %vm508, %v468, %v507
        %vm510 = vcmask 1046534
        %v511 = vsel %vm510, %v475, %v509
        %vm512 = vcmask 1047559
        %v513 = vsel %vm512, %v482, %v511
        %v514 = vsel %vm426, %v513, 0
        %516 = vmatpush.msra.mxu0 0.0
        %517 = vmatpush.msra.mxu0 0.0
        %518 = vmatpush.msra.mxu0 0.0
        %519 = vmatpush.msra.mxu0 0.0
        %520 = vmatpush.msra.mxu0 0.0
        %521 = vmatpush.msra.mxu0 0.0
        %522 = vmatpush.msra.mxu0 0.0
        %523 = vmatpush.msra.mxu0 0.0
        %524 = vmatpush.msra.mxu0 %v491
        %525 = vmatpush.msra.mxu0 %v490
        %526 = vmatpush.msra.mxu0 %v489
        %527 = vmatpush.msra.mxu0 %v488
        %528 = vmatpush.msra.mxu0 %v487
        %529 = vmatpush.msra.mxu0 %v486
        %530 = vmatpush.msra.mxu0 %v485
        %531 = vmatpush.msra.mxu0 %v484
        %532 = vmatmul.f32.gmra.mxu0 %v514
        %v533 = vpop.f32.mrf.mxu0
        %v534 = vadd.f32 0.0, %v533
        %535 = vdwg.mxu0
        %v536 = vadd.f32 %v483, %v534
        %537 = vst [vmem:[#allocation2] sm:$0xff] %v536
        %p538 = scmp.eq.s32.totalorder %s29, 1
        // Predicated region
        $region61: #{tpu_custom_call.1} parent=43 // pred_check
          %p539 = pneg %p538
        $region62: #{tpu_custom_call.1} parent=43 // pred_check_branch
          %541 = sbr.rel (%p539) target = $region64
        $region63: #{tpu_custom_call.1} parent=43 // pred_region
          %v542 = vld [vmem:[#allocation2] sm:$0xff]
          %v543 = vld [vmem:[#allocation6] sm:$0xff]
          %v544 = vld [vmem:[#allocation6 + $0x8] sm:$0xff]
          %v545 = vld [vmem:[#allocation6 + $0x10] sm:$0xff]
          %v546 = vld [vmem:[#allocation6 + $0x18] sm:$0xff]
          %v547 = vld [vmem:[#allocation6 + $0x20] sm:$0xff]
          %v548 = vld [vmem:[#allocation6 + $0x28] sm:$0xff]
          %v549 = vld [vmem:[#allocation6 + $0x30] sm:$0xff]
          %v550 = vld [vmem:[#allocation6 + $0x38] sm:$0xff]
          %v551 = vld [vmem:[#allocation6 + $0x40] sm:$0xff]
          %v552 = vld [vmem:[#allocation6 + $0x48] sm:$0xff]
          %v553 = vld [vmem:[#allocation6 + $0x50] sm:$0xff]
          %v554 = vld [vmem:[#allocation6 + $0x58] sm:$0xff]
          %v555 = vld [vmem:[#allocation6 + $0x60] sm:$0xff]
          %v556 = vld [vmem:[#allocation6 + $0x68] sm:$0xff]
          %v557 = vld [vmem:[#allocation6 + $0x70] sm:$0xff]
          %v558 = vld [vmem:[#allocation6 + $0x78] sm:$0xff]
          %v559 = vld [vmem:[%s3] sm:$0x1]
          %v561 = vperm.slane %v559, 0
          %563 = vmatpush.msra.mxu0 %v558
          %564 = vmatpush.msra.mxu0 %v557
          %565 = vmatpush.msra.mxu0 %v556
          %566 = vmatpush.msra.mxu0 %v555
          %567 = vmatpush.msra.mxu0 %v554
          %568 = vmatpush.msra.mxu0 %v553
          %569 = vmatpush.msra.mxu0 %v552
          %570 = vmatpush.msra.mxu0 %v551
          %571 = vmatpush.msra.mxu0 %v550
          %572 = vmatpush.msra.mxu0 %v549
          %573 = vmatpush.msra.mxu0 %v548
          %574 = vmatpush.msra.mxu0 %v547
          %575 = vmatpush.msra.mxu0 %v546
          %576 = vmatpush.msra.mxu0 %v545
          %577 = vmatpush.msra.mxu0 %v544
          %578 = vmatpush.msra.mxu0 %v543
          %579 = vmatmul.f32.gmra.mxu0 %v542
          %v580 = vpop.f32.mrf.mxu0
          %v581 = vadd.f32 %v561, %v580
          %582 = vdwg.mxu0
          %v583 = vld [vmem:[#allocation8] sm:$0xff]
          %v584 = vld [vmem:[#allocation8 + $0x8] sm:$0xff]
          %v585 = vld [vmem:[#allocation8 + $0x10] sm:$0xff]
          %v586 = vld [vmem:[#allocation8 + $0x18] sm:$0xff]
          %v587 = vld [vmem:[#allocation8 + $0x20] sm:$0xff]
          %v588 = vld [vmem:[#allocation8 + $0x28] sm:$0xff]
          %v589 = vld [vmem:[#allocation8 + $0x30] sm:$0xff]
          %v590 = vld [vmem:[#allocation8 + $0x38] sm:$0xff]
          %v591 = vld [vmem:[#allocation8 + $0x40] sm:$0xff]
          %v592 = vld [vmem:[#allocation8 + $0x48] sm:$0xff]
          %v593 = vld [vmem:[#allocation8 + $0x50] sm:$0xff]
          %v594 = vld [vmem:[#allocation8 + $0x58] sm:$0xff]
          %v595 = vld [vmem:[#allocation8 + $0x60] sm:$0xff]
          %v596 = vld [vmem:[#allocation8 + $0x68] sm:$0xff]
          %v597 = vld [vmem:[#allocation8 + $0x70] sm:$0xff]
          %v598 = vld [vmem:[#allocation8 + $0x78] sm:$0xff]
          %v599 = vld [vmem:[%s5] sm:$0x1]
          %v601 = vperm.slane %v599, 0
          %603 = vmatpush.msra.mxu0 %v598
          %604 = vmatpush.msra.mxu0 %v597
          %605 = vmatpush.msra.mxu0 %v596
          %606 = vmatpush.msra.mxu0 %v595
          %607 = vmatpush.msra.mxu0 %v594
          %608 = vmatpush.msra.mxu0 %v593
          %609 = vmatpush.msra.mxu0 %v592
          %610 = vmatpush.msra.mxu0 %v591
          %611 = vmatpush.msra.mxu0 %v590
          %612 = vmatpush.msra.mxu0 %v589
          %613 = vmatpush.msra.mxu0 %v588
          %614 = vmatpush.msra.mxu0 %v587
          %615 = vmatpush.msra.mxu0 %v586
          %616 = vmatpush.msra.mxu0 %v585
          %617 = vmatpush.msra.mxu0 %v584
          %618 = vmatpush.msra.mxu0 %v583
          %619 = vmatmul.f32.gmra.mxu0 %v581
          %v620 = vpop.f32.mrf.mxu0
          %v621 = vadd.f32 %v601, %v620
          %622 = vdwg.mxu0
          %623 = vst [vmem:[%s329] sm:$0xff] %v621
        $region64: #{tpu_custom_call.1} parent=43 // pred_fallthru
          _
        %s624 = sand.u32 %s180, 1
        %s625 = scalar_lea.sflag [#allocation5], %s624
        %s626 = sand.u32 %s180, 1
        %s627 = smul.addr %s626, 8
        %s628 = scalar_lea.vmem [#allocation9], %s627
        // Predicated region
        $region65: #{tpu_custom_call.1} parent=43 // pred_check
          %p629 = pneg %p190
        $region66: #{tpu_custom_call.1} parent=43 // pred_check_branch
          %631 = sbr.rel (%p629) target = $region68
        $region67: #{tpu_custom_call.1} parent=43 // pred_region
          %633 = vsyncadd %s625, 0
          %s634 = smul.addr %s28, 8
          %s635 = scalar_lea.hbm %s6, %s634
          %s637 = sshll.u32 %s628, 4
          %s638 = int_to_ptr.vmem [resolvable:$true] %s637
          %s639 = sshll.u32 %s635, 4
          %s640 = int_to_ptr.hbm [resolvable:$true] %s639
          %642 = dma.vmem_to_hbm [thread:$0]  %s638, 128, %s640, %s625
        $region68: #{tpu_custom_call.1} parent=43 // pred_fallthru
          _
      $region44: #{tpu_custom_call.1} parent=5 // pred_fallthru
        _
      %p643 = scmp.le.s32.totalorder 2, %s19
      // Predicated region
      $region69: #{tpu_custom_call.1} parent=5 // pred_check
        %p644 = pneg %p643
      $region70: #{tpu_custom_call.1} parent=5 // pred_check_branch
        %646 = sbr.rel (%p644) target = $region72
      $region71: #{tpu_custom_call.1} parent=5 // pred_region
        %s647 = ssub.s32 %s19, 2
        // Predicated region
        $region73: #{tpu_custom_call.1} parent=71 // pred_check
          %p648 = pneg %p196
        $region74: #{tpu_custom_call.1} parent=71 // pred_check_branch
          %650 = sbr.rel (%p648) target = $region76
        $region75: #{tpu_custom_call.1} parent=71 // pred_region
          %s651 = sand.u32 %s181, 1
          %s652 = scalar_lea.sflag [#allocation5], %s651
          %s653 = sand.u32 %s181, 1
          %s654 = smul.addr %s653, 8
          %s655 = scalar_lea.vmem [#allocation9], %s654
          %657 = dma.done %s652, 128
        $region76: #{tpu_custom_call.1} parent=71 // pred_fallthru
          _
      $region72: #{tpu_custom_call.1} parent=5 // pred_fallthru
        _
    $region6: #{tpu_custom_call.1} parent=1 // loop_footer
      %s23 = sadd.s32 1, %s19
    $region7: #{tpu_custom_call.1} parent=1 // loop_footer_branch
      %18 = sbr.rel target = $region3
    $region8: #{tpu_custom_call.1} parent=1 // loop_exit
      _
    %658 = vsyncpa [#allocation4], 1
    %s659 = scalar_lea.sflag [#allocation4], 1
    %660 = vsyncpa %s659, 1
    %661 = vsyncpa [#allocation7], 1
    %662 = vsyncpa [#allocation5], 1
    %s663 = scalar_lea.sflag [#allocation5], 1
    %664 = vsyncpa %s663, 1

</llo_original>
